<compile_context>
chip_gen: v6e
topology: v6e:2x2x1
jax: 0.10.0
libtpu: 0.0.40
codegen_flags: <defaults>
</compile_context>

<pallas_src>
import jax
import jax.numpy as jnp
from jax.experimental import pallas as pl
from jax.experimental.pallas import tpu as pltpu

TEMPERATURE = 0.07       # unused in the returned loss (matches PyTorch forward)
LABEL_SMOOTHING = 0.1
HARD_WEIGHT = 1.0        # unused in forward

_MIB = 1024 * 1024


def _vmem_caps():
    """(tile_budget_bytes, vmem_limit_cap_bytes), generation-aware."""
    try:
        cap = int(pltpu.get_tpu_info().vmem_capacity_bytes)
    except Exception:
        cap = 64 * _MIB            # conservative default (v7x per-TC VMEM)
    # Leave ~16 MiB headroom for Mosaic internals; never below 32 MiB.
    limit_cap = max(32 * _MIB, min(cap - 16 * _MIB, 100 * _MIB))
    budget = max(24 * _MIB, limit_cap - 4 * _MIB)   # margin for out blocks/misc
    return budget, limit_cap


def _pick_tiling(B, itemsize, budget):
    """Choose row-tile size TM. Returns (TM, multi_tile)."""
    if B % 128 != 0 or B < 256:
        # Small problems, or non-128-multiple B: single full block.
        # TODO(synk): large non-128-multiple B may exceed VMEM here.
        return B, False

    def est_bytes(tm):
        # 2 inputs x 2 double-buffers of (tm, B) + f32 intermediates (~2 copies).
        return 4 * tm * B * itemsize + 2 * tm * B * 4

    candidates = [tm for tm in (2048, 1024, 512, 256, 128) if B % tm == 0]
    feasible = [tm for tm in candidates if est_bytes(tm) <= budget]
    if not feasible:
        return 128, True           # huge B: smallest lane-aligned tile

    # Prefer >= 8 grid steps (>= 4 per TensorCore on v7x) with an even count,
    # then relax; within a tier pick the largest tile (fewest steps/overhead).
    for min_steps, want_even in ((8, True), (8, False), (4, True),
                                 (4, False), (2, False), (1, False)):
        for tm in feasible:
            nt = B // tm
            if nt >= min_steps and (not want_even or nt % 2 == 0):
                return tm, True
    return feasible[0], True


def _make_kernel(TM, B, eps, multi_tile):
    C = B
    smooth = eps / C
    hard = 1.0 - eps

    def per_sample_ce(x_ref, off, eye_mask):
        # Upcast inside the pass so only one matrix's f32 intermediates are live.
        x = x_ref[...].astype(jnp.float32)                              # (TM, C)
        m = jnp.max(x, axis=-1, keepdims=True)                          # (TM, 1)
        lse = jnp.log(jnp.sum(jnp.exp(x - m), axis=-1, keepdims=True))  # (TM, 1)
        sum_x = jnp.sum(x, axis=-1, keepdims=True)                      # (TM, 1)
        sum_logp = sum_x - C * (m + lse)          # sum_j logp[j], no logp tensor
        if multi_tile:
            # Diagonal (true-class) sub-block sliced from the resident row tile.
            xd = x_ref[:, pl.ds(off, TM)].astype(jnp.float32)           # (TM, TM)
        else:
            xd = x                                 # single tile: row tile == full
        diag_x = jnp.sum(jnp.where(eye_mask, xd, 0.0), axis=-1, keepdims=True)
        diag_logp = diag_x - m - lse
        return -hard * diag_logp - smooth * sum_logp                    # (TM, 1)

    def kernel(li_ref, lt_ref, out_ref):
        # 128-aligned column offset of the diagonal block for this row tile.
        off = pl.multiple_of(pl.program_id(0) * TM, 128)
        # (TM, TM) diagonal mask built once, shared by both CE passes.
        rid = jax.lax.broadcasted_iota(jnp.int32, (TM, TM), 0)
        cid = jax.lax.broadcasted_iota(jnp.int32, (TM, TM), 1)
        eye_mask = rid == cid
        out_ref[...] = (per_sample_ce(li_ref, off, eye_mask)
                        + per_sample_ce(lt_ref, off, eye_mask))

    return kernel


def clip_loss(logits_per_image, logits_per_text, tile_rows=None):
    B = logits_per_image.shape[0]
    assert logits_per_image.shape == (B, B), "CLIP logits must be square (B, B)"
    assert logits_per_text.shape == (B, B), "CLIP logits must be square (B, B)"

    itemsize = jnp.dtype(logits_per_image.dtype).itemsize
    budget, limit_cap = _vmem_caps()

    if tile_rows is None:
        TM, multi_tile = _pick_tiling(B, itemsize, budget)
    else:
        TM = int(tile_rows)
        assert B % TM == 0, "tile_rows must divide B"
        multi_tile = TM != B
        assert (not multi_tile) or TM % 128 == 0, "multi-tile requires TM % 128 == 0"
    num_tiles = B // TM

    kernel = _make_kernel(TM, B, LABEL_SMOOTHING, multi_tile)

    # 2 inputs x 2 double-buffers + f32 intermediates + small margin.
    est = 4 * TM * B * itemsize + 2 * TM * B * 4 + 2 * _MIB
    vmem_limit = int(min(limit_cap, max(32 * _MIB, est)))

    per_sample = pl.pallas_call(
        kernel,
        out_shape=jax.ShapeDtypeStruct((B, 1), jnp.float32),
        grid_spec=pltpu.PrefetchScalarGridSpec(
            num_scalar_prefetch=0,
            grid=(num_tiles,),
            in_specs=[
                pl.BlockSpec((TM, B), lambda i: (i, 0)),   # logits_per_image tile
                pl.BlockSpec((TM, B), lambda i: (i, 0)),   # logits_per_text tile
            ],
            out_specs=pl.BlockSpec((TM, 1), lambda i: (i, 0)),
        ),
        compiler_params=pltpu.CompilerParams(
            dimension_semantics=("parallel",),
            vmem_limit_bytes=vmem_limit,
        ),
    )(logits_per_image, logits_per_text)

    # per_sample[r] = CE_i2t(row r) + CE_t2i(row r); mean over B rows, then /2.
    return jnp.sum(per_sample) * (1.0 / (2.0 * B))


# ---------------------------------------------------------------------------
# Pure-JAX reference (independent implementation) for correctness checking.
# ---------------------------------------------------------------------------
def _ref_smoothed_ce(x, eps):
    B, C = x.shape
    logp = jax.nn.log_softmax(x.astype(jnp.float32), axis=-1)
    labels = jnp.arange(B)
    nll = -jnp.take_along_axis(logp, labels[:, None], axis=-1)[:, 0]
    smooth = -jnp.sum(logp, axis=-1) / C
    return jnp.mean((1.0 - eps) * nll + eps * C * (smooth / C))


def _ref_clip_loss(li, lt):
    return 0.5 * (_ref_smoothed_ce(li, LABEL_SMOOTHING)
                  + _ref_smoothed_ce(lt, LABEL_SMOOTHING))


if __name__ == "__main__":
    key = jax.random.PRNGKey(0)
    k1, k2, k3 = jax.random.split(key, 3)

    # Small shape consistent with the module: logits are (B, B) similarity logits.
    B = 8
    logits_per_image = jax.random.normal(k1, (B, B), dtype=jnp.float32)
    logits_per_text = logits_per_image.T + 0.01 * jax.random.normal(
        k2, (B, B), dtype=jnp.float32)

    loss = clip_loss(logits_per_image, logits_per_text)
    jax.block_until_ready(loss)
    ref = _ref_clip_loss(logits_per_image, logits_per_text)
    assert jnp.allclose(loss, ref, rtol=1e-5, atol=1e-5), (loss, ref)

    # Multi-tile (pipelined, parallel-grid) path with explicit tile size.
    B2 = 256
    li2 = jax.random.normal(k3, (B2, B2), dtype=jnp.float32)
    lt2 = li2.T
    loss2 = clip_loss(li2, lt2, tile_rows=128)
    jax.block_until_ready(loss2)
    ref2 = _ref_clip_loss(li2, lt2)
    assert jnp.allclose(loss2, ref2, rtol=1e-5, atol=1e-5), (loss2, ref2)

    # Auto-tiling path (generation/dtype-aware budget), bf16 inputs.
    li3 = li2.astype(jnp.bfloat16)
    lt3 = lt2.astype(jnp.bfloat16)
    loss3 = clip_loss(li3, lt3)
    jax.block_until_ready(loss3)
    ref3 = _ref_clip_loss(li3, lt3)
    assert jnp.allclose(loss3, ref3, rtol=1e-4, atol=1e-4), (loss3, ref3)

    print("KERNEL_OK")
</pallas_src>

<mosaic_0001>
module attributes {stable_mosaic.version = 11 : i64} {
  func.func @kernel(%arg0: i32, %arg1: memref<8x8xf32, #tpu.memory_space<vmem>>, %arg2: memref<8x8xf32, #tpu.memory_space<vmem>>, %arg3: memref<8x1xf32, #tpu.memory_space<vmem>>) attributes {dimension_semantics = [#tpu.dimension_semantics<parallel>], iteration_bounds = array<i64: 1>, scalar_prefetch = 0 : i64, scratch_operands = 0 : i64, tpu.core_type = #tpu.core_type<tc>, window_params = [{transform_indices = @transform_0, window_bounds = array<i64: 8, 8>}, {transform_indices = @transform_1, window_bounds = array<i64: 8, 8>}, {transform_indices = @transform_2, window_bounds = array<i64: 8, 1>}]} {
    %0 = tpu.iota {dimensions = array<i32: 0>} : vector<8x8xi32>
    %1 = tpu.iota {dimensions = array<i32: 1>} : vector<8x8xi32>
    %2 = arith.cmpi eq, %0, %1 : vector<8x8xi32>
    %c0 = arith.constant 0 : index
    %c0_0 = arith.constant 0 : index
    %3 = vector.load %arg1[%c0, %c0_0] : memref<8x8xf32, #tpu.memory_space<vmem>>, vector<8x8xf32>
    %cst = arith.constant dense<0xFF800000> : vector<8xf32>
    %4 = vector.multi_reduction <maximumf>, %3, %cst [1] : vector<8x8xf32> to vector<8xf32>
    %5 = vector.shape_cast %4 : vector<8xf32> to vector<8x1xf32>
    %6 = vector.broadcast %5 : vector<8x1xf32> to vector<8x8xf32>
    %7 = arith.subf %3, %6 : vector<8x8xf32>
    %8 = math.exp %7 : vector<8x8xf32>
    %cst_1 = arith.constant dense<0.000000e+00> : vector<8xf32>
    %9 = vector.multi_reduction <add>, %8, %cst_1 [1] : vector<8x8xf32> to vector<8xf32>
    %10 = vector.shape_cast %9 : vector<8xf32> to vector<8x1xf32>
    %11 = math.log %10 : vector<8x1xf32>
    %cst_2 = arith.constant dense<0.000000e+00> : vector<8xf32>
    %12 = vector.multi_reduction <add>, %3, %cst_2 [1] : vector<8x8xf32> to vector<8xf32>
    %13 = vector.shape_cast %12 : vector<8xf32> to vector<8x1xf32>
    %14 = arith.addf %5, %11 : vector<8x1xf32>
    %cst_3 = arith.constant 8.000000e+00 : f32
    %15 = vector.broadcast %cst_3 : f32 to vector<8x1xf32>
    %16 = arith.mulf %15, %14 : vector<8x1xf32>
    %17 = arith.subf %13, %16 : vector<8x1xf32>
    %cst_4 = arith.constant 0.000000e+00 : f32
    %18 = vector.broadcast %cst_4 : f32 to vector<8x8xf32>
    %19 = arith.select %2, %3, %18 : vector<8x8xi1>, vector<8x8xf32>
    %cst_5 = arith.constant dense<0.000000e+00> : vector<8xf32>
    %20 = vector.multi_reduction <add>, %19, %cst_5 [1] : vector<8x8xf32> to vector<8xf32>
    %21 = vector.shape_cast %20 : vector<8xf32> to vector<8x1xf32>
    %22 = arith.subf %21, %5 : vector<8x1xf32>
    %23 = arith.subf %22, %11 : vector<8x1xf32>
    %cst_6 = arith.constant -0.899999976 : f32
    %24 = vector.broadcast %cst_6 : f32 to vector<8x1xf32>
    %25 = arith.mulf %24, %23 : vector<8x1xf32>
    %cst_7 = arith.constant 1.250000e-02 : f32
    %26 = vector.broadcast %cst_7 : f32 to vector<8x1xf32>
    %27 = arith.mulf %26, %17 : vector<8x1xf32>
    %28 = arith.subf %25, %27 : vector<8x1xf32>
    %c0_8 = arith.constant 0 : index
    %c0_9 = arith.constant 0 : index
    %29 = vector.load %arg2[%c0_8, %c0_9] : memref<8x8xf32, #tpu.memory_space<vmem>>, vector<8x8xf32>
    %cst_10 = arith.constant dense<0xFF800000> : vector<8xf32>
    %30 = vector.multi_reduction <maximumf>, %29, %cst_10 [1] : vector<8x8xf32> to vector<8xf32>
    %31 = vector.shape_cast %30 : vector<8xf32> to vector<8x1xf32>
    %32 = vector.broadcast %31 : vector<8x1xf32> to vector<8x8xf32>
    %33 = arith.subf %29, %32 : vector<8x8xf32>
    %34 = math.exp %33 : vector<8x8xf32>
    %cst_11 = arith.constant dense<0.000000e+00> : vector<8xf32>
    %35 = vector.multi_reduction <add>, %34, %cst_11 [1] : vector<8x8xf32> to vector<8xf32>
    %36 = vector.shape_cast %35 : vector<8xf32> to vector<8x1xf32>
    %37 = math.log %36 : vector<8x1xf32>
    %cst_12 = arith.constant dense<0.000000e+00> : vector<8xf32>
    %38 = vector.multi_reduction <add>, %29, %cst_12 [1] : vector<8x8xf32> to vector<8xf32>
    %39 = vector.shape_cast %38 : vector<8xf32> to vector<8x1xf32>
    %40 = arith.addf %31, %37 : vector<8x1xf32>
    %cst_13 = arith.constant 8.000000e+00 : f32
    %41 = vector.broadcast %cst_13 : f32 to vector<8x1xf32>
    %42 = arith.mulf %41, %40 : vector<8x1xf32>
    %43 = arith.subf %39, %42 : vector<8x1xf32>
    %cst_14 = arith.constant 0.000000e+00 : f32
    %44 = vector.broadcast %cst_14 : f32 to vector<8x8xf32>
    %45 = arith.select %2, %29, %44 : vector<8x8xi1>, vector<8x8xf32>
    %cst_15 = arith.constant dense<0.000000e+00> : vector<8xf32>
    %46 = vector.multi_reduction <add>, %45, %cst_15 [1] : vector<8x8xf32> to vector<8xf32>
    %47 = vector.shape_cast %46 : vector<8xf32> to vector<8x1xf32>
    %48 = arith.subf %47, %31 : vector<8x1xf32>
    %49 = arith.subf %48, %37 : vector<8x1xf32>
    %cst_16 = arith.constant -0.899999976 : f32
    %50 = vector.broadcast %cst_16 : f32 to vector<8x1xf32>
    %51 = arith.mulf %50, %49 : vector<8x1xf32>
    %cst_17 = arith.constant 1.250000e-02 : f32
    %52 = vector.broadcast %cst_17 : f32 to vector<8x1xf32>
    %53 = arith.mulf %52, %43 : vector<8x1xf32>
    %54 = arith.subf %51, %53 : vector<8x1xf32>
    %55 = arith.addf %28, %54 : vector<8x1xf32>
    %c0_18 = arith.constant 0 : index
    %c0_19 = arith.constant 0 : index
    %56 = vector.load %arg3[%c0_18, %c0_19] : memref<8x1xf32, #tpu.memory_space<vmem>>, vector<8x1xf32>
    tpu.vector_store %arg3[%c0_18, %c0_19], %55 {strides = array<i32>} : memref<8x1xf32, #tpu.memory_space<vmem>>, vector<8x1xf32>,
    return
  }
  func.func @transform_0(%arg0: i32) -> (i32, i32) {
    %c0_i32 = arith.constant 0 : i32
    %c0_i32_0 = arith.constant 0 : i32
    return %arg0, %c0_i32 : i32, i32
  }
  func.func @transform_1(%arg0: i32) -> (i32, i32) {
    %c0_i32 = arith.constant 0 : i32
    %c0_i32_0 = arith.constant 0 : i32
    return %arg0, %c0_i32 : i32, i32
  }
  func.func @transform_2(%arg0: i32) -> (i32, i32) {
    %c0_i32 = arith.constant 0 : i32
    %c0_i32_0 = arith.constant 0 : i32
    return %arg0, %c0_i32 : i32, i32
  }
}

</mosaic_0001>

<llo_original>
// kernel: tpu_custom_call.1
$region0: #{tpu_custom_call.1}
  #allocation0 [shape = 'u32[]', space=smem, size = 0x4, offset = 0x4, fixed_abs, tag = 'smem constant byte address 0x4 - core index']
  #allocation1 [shape = 'u32[144,128]{1,0:T(1,128)}', space=vmem, size = 0x12000, scoped, tag = 'internal scratch']
  %s0 = inlined_call_operand.hbm [shape: f32[8,8], index: 0, kind: input, shape index: {}]
  %s1 = inlined_call_operand.hbm [shape: f32[8,8], index: 1, kind: input, shape index: {}]
  %s2 = inlined_call_operand.vmem [shape: f32[8,1], index: 2, kind: output, shape index: {}]
  %s3 = sld [smem:[#allocation0]]
  $region26: #{tpu_custom_call.1} parent=0
    _
  %s5 = ssub.s32 1, %s3
  %s6 = scalar_select 0, %s5, %s3
  $region1: #{tpu_custom_call.1} parent=0
    #allocation2 [shape = 'u8[4096]{0}', space=vmem, size = 0x1000, scoped, tag = 'input window, operand 0, single buffered']
    #allocation3 [shape = 's32[1]{0}', space=sflag, size = 0x4, scoped, tag = 'scoped memory for tpu_custom_call.1']
    #allocation4 [shape = 'u8[4096]{0}', space=vmem, size = 0x1000, scoped, tag = 'input window, operand 1, single buffered']
    #allocation5 [shape = 's32[1]{0}', space=sflag, size = 0x4, scoped, tag = 'scoped memory for tpu_custom_call.1']
    %7 = vsyncpa [#allocation3], 0
    %8 = vsyncpa [#allocation5], 0
    // Predicated region
    $region2: #{tpu_custom_call.1} parent=1 // pred_check
      _
    $region3: #{tpu_custom_call.1} parent=1 // pred_check_branch
      %10 = sbr.rel (0) target = $region5
    $region4: #{tpu_custom_call.1} parent=1 // pred_region
      %s12 = ssub.s32 128, 128
      %13 = vsyncadd [#allocation3], %s12
      %s15 = sshll.u32 [#allocation2], 4
      %s16 = int_to_ptr.vmem [resolvable:$true] %s15
      %18 = dma.hbm_to_vmem [thread:$0]  %s0, 128, %s16, [#allocation3]
    $region5: #{tpu_custom_call.1} parent=1 // pred_fallthru
      _
    // Predicated region
    $region6: #{tpu_custom_call.1} parent=1 // pred_check
      _
    $region7: #{tpu_custom_call.1} parent=1 // pred_check_branch
      %20 = sbr.rel (0) target = $region9
    $region8: #{tpu_custom_call.1} parent=1 // pred_region
      %s22 = ssub.s32 128, 128
      %23 = vsyncadd [#allocation5], %s22
      %s25 = sshll.u32 [#allocation4], 4
      %s26 = int_to_ptr.vmem [resolvable:$true] %s25
      %28 = dma.hbm_to_vmem [thread:$0]  %s1, 128, %s26, [#allocation5]
    $region9: #{tpu_custom_call.1} parent=1 // pred_fallthru
      _
    // Predicated region
    $region10: #{tpu_custom_call.1} parent=1 // pred_check
      _
    $region11: #{tpu_custom_call.1} parent=1 // pred_check_branch
      %30 = sbr.rel (0) target = $region13
    $region12: #{tpu_custom_call.1} parent=1 // pred_region
      %31 = dma.done [#allocation3], 128
    $region13: #{tpu_custom_call.1} parent=1 // pred_fallthru
      _
    // Predicated region
    $region14: #{tpu_custom_call.1} parent=1 // pred_check
      _
    $region15: #{tpu_custom_call.1} parent=1 // pred_check_branch
      %33 = sbr.rel (0) target = $region17
    $region16: #{tpu_custom_call.1} parent=1 // pred_region
      %34 = dma.done [#allocation5], 128
    $region17: #{tpu_custom_call.1} parent=1 // pred_fallthru
      _
    %v35 = vlaneseq
    %v36 = vshrl.u32 %v35, 7
    %v37 = vlaneseq
    %v38 = vand.u32 %v37, 127
    %vm39 = vcmp.eq.s32.totalorder %v36, %v38
    %v40 = vld [vmem:[#allocation2] sm:$0xff]
    %vm41 = vcmask 64512
    %v42 = vsel %vm41, %v40, -inf
    %43 = vmax.xlane.f32.xlu0 %v42
    %v44 = vpop.xlane.xlu0 %43
    %v45 = vsub.f32 %v40, %v44
    %v46 = vmul.f32 %v45, 1.442695
    %v47 = vpow.pop %v46
    %v48 = vsel %vm41, %v47, 0.0
    %49 = vadd.xlane.f32.xlu0 %v48
    %v50 = vpop.xlane.xlu0 %49
    %v51 = vlog2.pop %v50
    %v52 = vmul.f32 %v51, 0.6931472
    %v53 = vsel %vm41, %v40, 0.0
    %54 = vadd.xlane.f32.xlu0 %v53
    %v55 = vpop.xlane.xlu0 %54
    %v56 = vadd.f32 %v44, %v52
    %v57 = vmul.f32 %v56, 8.0
    %v58 = vsub.f32 %v55, %v57
    %v59 = vsel %vm39, %v40, 0.0
    %v60 = vsel %vm41, %v59, 0.0
    %61 = vadd.xlane.f32.xlu0 %v60
    %v62 = vpop.xlane.xlu0 %61
    %v63 = vsub.f32 %v62, %v44
    %v64 = vsub.f32 %v63, %v52
    %v65 = vmul.f32 %v64, -0.9
    %v66 = vmul.f32 %v58, 0.0125
    %v67 = vsub.f32 %v65, %v66
    %v68 = vld [vmem:[#allocation4] sm:$0xff]
    %v69 = vsel %vm41, %v68, -inf
    %70 = vmax.xlane.f32.xlu0 %v69
    %v71 = vpop.xlane.xlu0 %70
    %v72 = vsub.f32 %v68, %v71
    %v73 = vmul.f32 %v72, 1.442695
    %v74 = vpow.pop %v73
    %v75 = vsel %vm41, %v74, 0.0
    %76 = vadd.xlane.f32.xlu0 %v75
    %v77 = vpop.xlane.xlu0 %76
    %v78 = vlog2.pop %v77
    %v79 = vmul.f32 %v78, 0.6931472
    %v80 = vsel %vm41, %v68, 0.0
    %81 = vadd.xlane.f32.xlu0 %v80
    %v82 = vpop.xlane.xlu0 %81
    %v83 = vadd.f32 %v71, %v79
    %v84 = vmul.f32 %v83, 8.0
    %v85 = vsub.f32 %v82, %v84
    %v86 = vsel %vm39, %v68, 0.0
    %v87 = vsel %vm41, %v86, 0.0
    %88 = vadd.xlane.f32.xlu0 %v87
    %v89 = vpop.xlane.xlu0 %88
    %v90 = vsub.f32 %v89, %v71
    %v91 = vsub.f32 %v90, %v79
    %v92 = vmul.f32 %v91, -0.9
    %v93 = vmul.f32 %v85, 0.0125
    %v94 = vsub.f32 %v92, %v93
    %v95 = vadd.f32 %v67, %v94
    %vm96 = vcmask 7168
    %97 = vst.msk [vmem:[%s2] sm:$0xff] %vm96, %v95
    // Predicated region
    $region18: #{tpu_custom_call.1} parent=1 // pred_check
      _
    $region19: #{tpu_custom_call.1} parent=1 // pred_check_branch
      %99 = sbr.rel (0) target = $region21
    $region20: #{tpu_custom_call.1} parent=1 // pred_region
      _
    $region21: #{tpu_custom_call.1} parent=1 // pred_fallthru
      _
    // Predicated region
    $region22: #{tpu_custom_call.1} parent=1 // pred_check
      _
    $region23: #{tpu_custom_call.1} parent=1 // pred_check_branch
      %101 = sbr.rel (0) target = $region25
    $region24: #{tpu_custom_call.1} parent=1 // pred_region
      _
    $region25: #{tpu_custom_call.1} parent=1 // pred_fallthru
      _
    %102 = vsyncpa [#allocation3], 1
    %103 = vsyncpa [#allocation5], 1

</llo_original>
